<compile_context>
chip_gen: v6e
topology: v6e:2x2x1
jax: 0.10.0
libtpu: 0.0.40
codegen_flags: <defaults>
</compile_context>

<pallas_src>
import functools

import jax
import jax.numpy as jnp
from jax.experimental import pallas as pl
from jax.experimental.pallas import tpu as pltpu


def _round_up(x, m):
    return ((x + m - 1) // m) * m


def _tpu_generation():
    """Best-effort TPU generation (4, 5, 6, 7); 0 if unknown."""
    try:
        kind = jax.devices()[0].device_kind.lower()
    except Exception:
        return 0
    for g in (7, 6, 5, 4):
        if f"v{g}" in kind:
            return g
    return 0


def _feature_mixer_kernel(x_ref, gamma_ref, beta_ref, w1_ref, b1_ref,
                          w2_ref, b2_ref, o_ref, *, eps, gelu_dtype):
    # x_ref: (Rt, D);  gamma/beta/b2: (1, D);  w1: (D, H);  b1: (1, H);  w2: (H, D)
    x = x_ref[...].astype(jnp.float32)                          # (Rt, D)

    # ---- LayerNorm over the feature dim.  One pass: both XLU reductions (sum
    # and sum-of-squares) issue together; var clamped >= 0 against cancellation
    # when |mean| >> std.
    mean = jnp.mean(x, axis=-1, keepdims=True)
    ex2 = jnp.mean(x * x, axis=-1, keepdims=True)
    var = jnp.maximum(ex2 - mean * mean, 0.0)
    ln = ((x - mean) * jax.lax.rsqrt(var + eps)
          * gamma_ref[...].astype(jnp.float32)
          + beta_ref[...].astype(jnp.float32))                  # (Rt, D), f32

    # ---- Linear 1 (MXU: low-precision operands, f32 accumulate).
    # w1 is stored (in, out) = (D, H): no in-kernel transpose.
    w1 = w1_ref[...]
    h = jnp.dot(ln.astype(w1.dtype), w1, preferred_element_type=jnp.float32)
    h = h + b1_ref[...].astype(jnp.float32)                     # (Rt, H), f32

    # ---- GELU (tanh form).  gelu_dtype is bf16 on v6e/v7x (bf16 VALU + EUP),
    # f32 on v5e; bf16 also feeds the second matmul without another cast pass.
    # TODO(synk): PyTorch nn.GELU() default is exact erf; the tanh approximation
    # differs by <3e-3 abs worst-case and is used to guarantee Mosaic lowering.
    hg = h.astype(gelu_dtype)
    a = 0.5 * hg * (1.0 + jnp.tanh(0.7978845608028654
                                   * (hg + 0.044715 * (hg * hg * hg))))

    # ---- Linear 2 (MXU).  w2 is (in, out) = (H, D).
    w2 = w2_ref[...]
    y = jnp.dot(a.astype(w2.dtype), w2, preferred_element_type=jnp.float32)
    y = y + b2_ref[...].astype(jnp.float32)                     # (Rt, D), f32

    # ---- Residual: re-load x from the resident input tile (cheap vld) rather
    # than keeping the f32 value live across both matmuls.
    o_ref[...] = (x_ref[...].astype(jnp.float32) + y).astype(o_ref.dtype)


def feature_mixer(x, gamma, beta, w1, b1, w2, b2, *,
                  eps=1e-5, row_tile=None, matmul_dtype=jnp.bfloat16):
    """FeatureMixerLayer forward: x + Linear2(GELU(Linear1(LayerNorm(x)))).

    x: (..., D).  gamma/beta: (D,).  w1: (D, H), b1: (H,).  w2: (H, D), b2: (D,).
    Linear weights are stored pre-transposed relative to nn.Linear (i.e. (in, out)).
    Pass w1/w2 already in `matmul_dtype` (cast once at load time) to avoid a
    per-call cast op.
    """
    orig_shape = x.shape
    D = orig_shape[-1]
    H = w1.shape[1]
    assert gamma.shape == (D,) and beta.shape == (D,)
    assert w1.shape == (D, H) and b1.shape == (H,)
    assert w2.shape == (H, D) and b2.shape == (D,)

    M = 1
    for s in orig_shape[:-1]:
        M *= s
    x2 = x.reshape(M, D)

    gen = _tpu_generation()

    # Elementwise (GELU) dtype: bf16 VALU/EUP exist only on v6e/v7x.
    gelu_dtype = jnp.bfloat16 if gen >= 6 else jnp.float32

    # Generation-dependent scoped-VMEM budget (v7x has only 64 MiB physical).
    vmem_limit = {7: 48 << 20, 6: 96 << 20, 5: 32 << 20}.get(gen, 32 << 20)

    # ---- Row tile selection -------------------------------------------------
    if row_tile is None:
        rt = {7: 512, 6: 1024, 5: 256}.get(gen, 256)
        if D < 128:
            # Small feature dim: lanes mostly idle -> per-step-overhead bound.
            # Raise rt until each input tile is >= ~1 MiB.
            rt = max(rt, pl.cdiv(1 << 20, 4 * D))
    else:
        rt = int(row_tile)
    rt = _round_up(max(rt, 8), 8)

    # Cap rt so double-buffered x/out tiles + resident weights + the (rt, H)
    # hidden activations fit comfortably inside the VMEM budget.
    weight_bytes = 4 * D * H * jnp.dtype(matmul_dtype).itemsize   # 2 mats, dbl-buf
    fixed_bytes = weight_bytes + 4 * (2 * D + H) * 4              # gamma/beta/b1/b2
    per_row_bytes = 4 * D * 4 + H * 4                             # x/out dbl-buf + hidden
    budget = int(0.6 * vmem_limit) - fixed_bytes
    if budget > 8 * per_row_bytes:
        rt = min(rt, (budget // per_row_bytes) // 8 * 8)
    rt = max(8, min(rt, _round_up(M, 8)))

    grid_m = pl.cdiv(M, rt)
    if gen >= 7 and grid_m > 1 and grid_m % 2 == 1:
        # Even number of grid steps so the "parallel" axis splits evenly over
        # the two TensorCores on v7x.
        rt = max(8, _round_up(pl.cdiv(M, grid_m + 1), 8))
        grid_m = pl.cdiv(M, rt)

    # ---- Parameters (cast only when not already in the requested dtype) -----
    w1c = w1 if w1.dtype == matmul_dtype else w1.astype(matmul_dtype)
    w2c = w2 if w2.dtype == matmul_dtype else w2.astype(matmul_dtype)
    gamma2 = gamma.reshape(1, D).astype(jnp.float32)
    beta2 = beta.reshape(1, D).astype(jnp.float32)
    b1_2 = b1.reshape(1, H).astype(jnp.float32)
    b2_2 = b2.reshape(1, D).astype(jnp.float32)

    # TODO(synk): for very large D*H on v7x (64 MiB VMEM), add an "arbitrary"
    # grid axis over H with a VMEM f32 accumulator (pl.when init/finalize) and
    # single-buffer (pl.Buffered(1)) the weight specs instead of shrinking rt.

    out = pl.pallas_call(
        functools.partial(_feature_mixer_kernel, eps=float(eps),
                          gelu_dtype=gelu_dtype),
        out_shape=jax.ShapeDtypeStruct((M, D), x.dtype),
        grid_spec=pltpu.PrefetchScalarGridSpec(
            num_scalar_prefetch=0,
            grid=(grid_m,),
            in_specs=[
                pl.BlockSpec((rt, D), lambda i: (i, 0)),   # x rows (ragged last tile masked)
                pl.BlockSpec((1, D), lambda i: (0, 0)),    # gamma (VMEM-resident)
                pl.BlockSpec((1, D), lambda i: (0, 0)),    # beta
                pl.BlockSpec((D, H), lambda i: (0, 0)),    # W1 (in, out) — no transpose
                pl.BlockSpec((1, H), lambda i: (0, 0)),    # b1
                pl.BlockSpec((H, D), lambda i: (0, 0)),    # W2 (in, out)
                pl.BlockSpec((1, D), lambda i: (0, 0)),    # b2
            ],
            out_specs=pl.BlockSpec((rt, D), lambda i: (i, 0)),
        ),
        compiler_params=pltpu.CompilerParams(
            # Row axis is independent -> shards across TensorCores on v7x.
            dimension_semantics=("parallel",),
            vmem_limit_bytes=vmem_limit,
        ),
    )(x2, gamma2, beta2, w1c, b1_2, w2c, b2_2)

    return out.reshape(orig_shape)


def feature_mixer_ref(x, gamma, beta, w1, b1, w2, b2, eps=1e-5):
    """Pure-JAX f32 reference matching the PyTorch module (exact-erf GELU)."""
    mean = jnp.mean(x, axis=-1, keepdims=True)
    var = jnp.mean((x - mean) ** 2, axis=-1, keepdims=True)
    ln = (x - mean) / jnp.sqrt(var + eps) * gamma + beta
    h = ln @ w1 + b1
    a = jax.nn.gelu(h, approximate=False)     # nn.GELU() default = exact erf
    y = a @ w2 + b2
    return x + y


if __name__ == "__main__":
    key = jax.random.PRNGKey(0)
    # Small shapes consistent with the module: tokens of feature_dim D, mlp_ratio=1.
    B, S, D = 2, 16, 32
    mlp_ratio = 1
    H = int(D * mlp_ratio)

    kx, k1, k2 = jax.random.split(key, 3)
    x = jax.random.normal(kx, (B, S, D), dtype=jnp.float32)

    # nn.Linear init: trunc_normal_(std=0.02), zero bias; LayerNorm: gamma=1, beta=0.
    # Weights stored pre-transposed as (in, out).
    w1 = jax.random.truncated_normal(k1, -2.0, 2.0, (D, H), jnp.float32) * 0.02
    b1 = jnp.zeros((H,), jnp.float32)
    w2 = jax.random.truncated_normal(k2, -2.0, 2.0, (H, D), jnp.float32) * 0.02
    b2 = jnp.zeros((D,), jnp.float32)
    gamma = jnp.ones((D,), jnp.float32)
    beta = jnp.zeros((D,), jnp.float32)

    # Cast matmul weights once at "load time" (hoisted out of the forward call).
    w1_bf16 = w1.astype(jnp.bfloat16)
    w2_bf16 = w2.astype(jnp.bfloat16)

    out = feature_mixer(x, gamma, beta, w1_bf16, b1, w2_bf16, b2)
    out = jax.block_until_ready(out)

    ref = feature_mixer_ref(x, gamma, beta, w1, b1, w2, b2)
    assert out.shape == x.shape
    # bf16 MXU operands + tanh-GELU vs f32/erf reference -> attention-grade tolerance.
    max_err = float(jnp.max(jnp.abs(out - ref)))
    assert jnp.allclose(out, ref, atol=2e-2, rtol=2e-2), f"mismatch vs reference: {max_err}"

    print("KERNEL_OK")
</pallas_src>

<mosaic_0001>
module attributes {stable_mosaic.version = 11 : i64} {
  func.func @_feature_mixer_kernel(%arg0: i32, %arg1: memref<32x32xf32, #tpu.memory_space<vmem>>, %arg2: memref<1x32xf32, #tpu.memory_space<vmem>>, %arg3: memref<1x32xf32, #tpu.memory_space<vmem>>, %arg4: memref<32x32xbf16, #tpu.memory_space<vmem>>, %arg5: memref<1x32xf32, #tpu.memory_space<vmem>>, %arg6: memref<32x32xbf16, #tpu.memory_space<vmem>>, %arg7: memref<1x32xf32, #tpu.memory_space<vmem>>, %arg8: memref<32x32xf32, #tpu.memory_space<vmem>>) attributes {dimension_semantics = [#tpu.dimension_semantics<parallel>], iteration_bounds = array<i64: 1>, scalar_prefetch = 0 : i64, scratch_operands = 0 : i64, tpu.core_type = #tpu.core_type<tc>, window_params = [{transform_indices = @transform_0, window_bounds = array<i64: 32, 32>}, {pipeline_mode = #tpu.pipeline_mode<synchronous>, transform_indices = @transform_1, window_bounds = array<i64: 1, 32>}, {pipeline_mode = #tpu.pipeline_mode<synchronous>, transform_indices = @transform_2, window_bounds = array<i64: 1, 32>}, {pipeline_mode = #tpu.pipeline_mode<synchronous>, transform_indices = @transform_3, window_bounds = array<i64: 32, 32>}, {pipeline_mode = #tpu.pipeline_mode<synchronous>, transform_indices = @transform_4, window_bounds = array<i64: 1, 32>}, {pipeline_mode = #tpu.pipeline_mode<synchronous>, transform_indices = @transform_5, window_bounds = array<i64: 32, 32>}, {pipeline_mode = #tpu.pipeline_mode<synchronous>, transform_indices = @transform_6, window_bounds = array<i64: 1, 32>}, {transform_indices = @transform_7, window_bounds = array<i64: 32, 32>}]} {
    %c0 = arith.constant 0 : index
    %c0_0 = arith.constant 0 : index
    %0 = vector.load %arg1[%c0, %c0_0] : memref<32x32xf32, #tpu.memory_space<vmem>>, vector<32x32xf32>
    %cst = arith.constant dense<0.000000e+00> : vector<32xf32>
    %1 = vector.multi_reduction <add>, %0, %cst [1] : vector<32x32xf32> to vector<32xf32>
    %2 = vector.shape_cast %1 : vector<32xf32> to vector<32x1xf32>
    %cst_1 = arith.constant 3.200000e+01 : f32
    %3 = vector.broadcast %cst_1 : f32 to vector<32x1xf32>
    %4 = arith.divf %2, %3 : vector<32x1xf32>
    %5 = arith.mulf %0, %0 : vector<32x32xf32>
    %cst_2 = arith.constant dense<0.000000e+00> : vector<32xf32>
    %6 = vector.multi_reduction <add>, %5, %cst_2 [1] : vector<32x32xf32> to vector<32xf32>
    %7 = vector.shape_cast %6 : vector<32xf32> to vector<32x1xf32>
    %cst_3 = arith.constant 3.200000e+01 : f32
    %8 = vector.broadcast %cst_3 : f32 to vector<32x1xf32>
    %9 = arith.divf %7, %8 : vector<32x1xf32>
    %10 = arith.mulf %4, %4 : vector<32x1xf32>
    %11 = arith.subf %9, %10 : vector<32x1xf32>
    %cst_4 = arith.constant 0.000000e+00 : f32
    %12 = vector.broadcast %cst_4 : f32 to vector<32x1xf32>
    %13 = arith.maximumf %11, %12 : vector<32x1xf32>
    %14 = vector.broadcast %4 : vector<32x1xf32> to vector<32x32xf32>
    %15 = arith.subf %0, %14 : vector<32x32xf32>
    %cst_5 = arith.constant 9.99999974E-6 : f32
    %16 = vector.broadcast %cst_5 : f32 to vector<32x1xf32>
    %17 = arith.addf %13, %16 : vector<32x1xf32>
    %18 = math.rsqrt %17 : vector<32x1xf32>
    %19 = vector.broadcast %18 : vector<32x1xf32> to vector<32x32xf32>
    %20 = arith.mulf %15, %19 : vector<32x32xf32>
    %c0_6 = arith.constant 0 : index
    %c0_7 = arith.constant 0 : index
    %21 = vector.load %arg2[%c0_6, %c0_7] : memref<1x32xf32, #tpu.memory_space<vmem>>, vector<1x32xf32>
    %22 = vector.broadcast %21 : vector<1x32xf32> to vector<32x32xf32>
    %23 = arith.mulf %20, %22 : vector<32x32xf32>
    %c0_8 = arith.constant 0 : index
    %c0_9 = arith.constant 0 : index
    %24 = vector.load %arg3[%c0_8, %c0_9] : memref<1x32xf32, #tpu.memory_space<vmem>>, vector<1x32xf32>
    %25 = vector.broadcast %24 : vector<1x32xf32> to vector<32x32xf32>
    %26 = arith.addf %23, %25 : vector<32x32xf32>
    %c0_10 = arith.constant 0 : index
    %c0_11 = arith.constant 0 : index
    %27 = vector.load %arg4[%c0_10, %c0_11] : memref<32x32xbf16, #tpu.memory_space<vmem>>, vector<32x32xbf16>
    %28 = arith.truncf %26 : vector<32x32xf32> to vector<32x32xbf16>
    %cst_12 = arith.constant dense<0.000000e+00> : vector<32x32xf32>
    %29 = tpu.matmul %28, %27, %cst_12 {dimension_numbers = #tpu.dot_dimension_numbers<[1], [0], [0], [1], [0, 0, 1, 1], [], []>} : vector<32x32xbf16>, vector<32x32xbf16>, vector<32x32xf32> -> vector<32x32xf32>
    %c0_13 = arith.constant 0 : index
    %c0_14 = arith.constant 0 : index
    %30 = vector.load %arg5[%c0_13, %c0_14] : memref<1x32xf32, #tpu.memory_space<vmem>>, vector<1x32xf32>
    %31 = vector.broadcast %30 : vector<1x32xf32> to vector<32x32xf32>
    %32 = arith.addf %29, %31 : vector<32x32xf32>
    %cst_15 = arith.constant 5.000000e-01 : f32
    %33 = vector.broadcast %cst_15 : f32 to vector<32x32xf32>
    %34 = arith.mulf %33, %32 : vector<32x32xf32>
    %35 = arith.mulf %32, %32 : vector<32x32xf32>
    %36 = arith.mulf %35, %32 : vector<32x32xf32>
    %cst_16 = arith.constant 4.471500e-02 : f32
    %37 = vector.broadcast %cst_16 : f32 to vector<32x32xf32>
    %38 = arith.mulf %37, %36 : vector<32x32xf32>
    %39 = arith.addf %32, %38 : vector<32x32xf32>
    %cst_17 = arith.constant 0.797884583 : f32
    %40 = vector.broadcast %cst_17 : f32 to vector<32x32xf32>
    %41 = arith.mulf %40, %39 : vector<32x32xf32>
    %42 = math.tanh %41 : vector<32x32xf32>
    %cst_18 = arith.constant 1.000000e+00 : f32
    %43 = vector.broadcast %cst_18 : f32 to vector<32x32xf32>
    %44 = arith.addf %43, %42 : vector<32x32xf32>
    %45 = arith.mulf %34, %44 : vector<32x32xf32>
    %c0_19 = arith.constant 0 : index
    %c0_20 = arith.constant 0 : index
    %46 = vector.load %arg6[%c0_19, %c0_20] : memref<32x32xbf16, #tpu.memory_space<vmem>>, vector<32x32xbf16>
    %47 = arith.truncf %45 : vector<32x32xf32> to vector<32x32xbf16>
    %cst_21 = arith.constant dense<0.000000e+00> : vector<32x32xf32>
    %48 = tpu.matmul %47, %46, %cst_21 {dimension_numbers = #tpu.dot_dimension_numbers<[1], [0], [0], [1], [0, 0, 1, 1], [], []>} : vector<32x32xbf16>, vector<32x32xbf16>, vector<32x32xf32> -> vector<32x32xf32>
    %c0_22 = arith.constant 0 : index
    %c0_23 = arith.constant 0 : index
    %49 = vector.load %arg7[%c0_22, %c0_23] : memref<1x32xf32, #tpu.memory_space<vmem>>, vector<1x32xf32>
    %50 = vector.broadcast %49 : vector<1x32xf32> to vector<32x32xf32>
    %51 = arith.addf %48, %50 : vector<32x32xf32>
    %c0_24 = arith.constant 0 : index
    %c0_25 = arith.constant 0 : index
    %52 = vector.load %arg1[%c0_24, %c0_25] : memref<32x32xf32, #tpu.memory_space<vmem>>, vector<32x32xf32>
    %53 = arith.addf %52, %51 : vector<32x32xf32>
    %c0_26 = arith.constant 0 : index
    %c0_27 = arith.constant 0 : index
    %54 = vector.load %arg8[%c0_26, %c0_27] : memref<32x32xf32, #tpu.memory_space<vmem>>, vector<32x32xf32>
    tpu.vector_store %arg8[%c0_26, %c0_27], %53 {strides = array<i32>} : memref<32x32xf32, #tpu.memory_space<vmem>>, vector<32x32xf32>,
    return
  }
  func.func @transform_0(%arg0: i32) -> (i32, i32) {
    %c0_i32 = arith.constant 0 : i32
    %c0_i32_0 = arith.constant 0 : i32
    return %arg0, %c0_i32 : i32, i32
  }
  func.func @transform_1(%arg0: i32) -> (i32, i32) {
    %c0_i32 = arith.constant 0 : i32
    %c0_i32_0 = arith.constant 0 : i32
    %c0_i32_1 = arith.constant 0 : i32
    return %c0_i32, %c0_i32_0 : i32, i32
  }
  func.func @transform_2(%arg0: i32) -> (i32, i32) {
    %c0_i32 = arith.constant 0 : i32
    %c0_i32_0 = arith.constant 0 : i32
    %c0_i32_1 = arith.constant 0 : i32
    return %c0_i32, %c0_i32_0 : i32, i32
  }
  func.func @transform_3(%arg0: i32) -> (i32, i32) {
    %c0_i32 = arith.constant 0 : i32
    %c0_i32_0 = arith.constant 0 : i32
    %c0_i32_1 = arith.constant 0 : i32
    return %c0_i32, %c0_i32_0 : i32, i32
  }
  func.func @transform_4(%arg0: i32) -> (i32, i32) {
    %c0_i32 = arith.constant 0 : i32
    %c0_i32_0 = arith.constant 0 : i32
    %c0_i32_1 = arith.constant 0 : i32
    return %c0_i32, %c0_i32_0 : i32, i32
  }
  func.func @transform_5(%arg0: i32) -> (i32, i32) {
    %c0_i32 = arith.constant 0 : i32
    %c0_i32_0 = arith.constant 0 : i32
    %c0_i32_1 = arith.constant 0 : i32
    return %c0_i32, %c0_i32_0 : i32, i32
  }
  func.func @transform_6(%arg0: i32) -> (i32, i32) {
    %c0_i32 = arith.constant 0 : i32
    %c0_i32_0 = arith.constant 0 : i32
    %c0_i32_1 = arith.constant 0 : i32
    return %c0_i32, %c0_i32_0 : i32, i32
  }
  func.func @transform_7(%arg0: i32) -> (i32, i32) {
    %c0_i32 = arith.constant 0 : i32
    %c0_i32_0 = arith.constant 0 : i32
    return %arg0, %c0_i32 : i32, i32
  }
}

</mosaic_0001>

<llo_original>
// kernel: tpu_custom_call.1
$region0: #{tpu_custom_call.1}
  #allocation0 [shape = 'u32[]', space=smem, size = 0x4, offset = 0x4, fixed_abs, tag = 'smem constant byte address 0x4 - core index']
  #allocation1 [shape = 'u32[144,128]{1,0:T(1,128)}', space=vmem, size = 0x12000, scoped, tag = 'internal scratch']
  %s0 = inlined_call_operand.hbm [shape: f32[32,32], index: 0, kind: input, shape index: {}]
  %s1 = inlined_call_operand.vmem [shape: f32[1,32], index: 1, kind: input, shape index: {}]
  %s2 = inlined_call_operand.vmem [shape: f32[1,32], index: 2, kind: input, shape index: {}]
  %s3 = inlined_call_operand.hbm [shape: bf16[32,32], index: 3, kind: input, shape index: {}]
  %s4 = inlined_call_operand.vmem [shape: f32[1,32], index: 4, kind: input, shape index: {}]
  %s5 = inlined_call_operand.hbm [shape: bf16[32,32], index: 5, kind: input, shape index: {}]
  %s6 = inlined_call_operand.vmem [shape: f32[1,32], index: 6, kind: input, shape index: {}]
  %s7 = inlined_call_operand.hbm [shape: f32[32,32], index: 7, kind: output, shape index: {}]
  %s8 = sld [smem:[#allocation0]]
  $region50: #{tpu_custom_call.1} parent=0
    _
  %s10 = ssub.s32 1, %s8
  %s11 = scalar_select 0, %s10, %s8
  $region1: #{tpu_custom_call.1} parent=0
    #allocation2 [shape = 'u8[16384]{0}', space=vmem, size = 0x4000, scoped, tag = 'input window, operand 0, single buffered']
    #allocation3 [shape = 's32[1]{0}', space=sflag, size = 0x4, scoped, tag = 'scoped memory for tpu_custom_call.1']
    #allocation4 [shape = 's32[1]{0}', space=sflag, size = 0x4, scoped, tag = 'scoped memory for tpu_custom_call.1']
    #allocation5 [shape = 'u8[8192]{0}', space=vmem, size = 0x2000, scoped, tag = 'input window, operand 3, single buffered']
    #allocation6 [shape = 's32[1]{0}', space=sflag, size = 0x4, scoped, tag = 'scoped memory for tpu_custom_call.1']
    #allocation7 [shape = 'u8[8192]{0}', space=vmem, size = 0x2000, scoped, tag = 'input window, operand 5, single buffered']
    #allocation8 [shape = 'u8[16384]{0}', space=vmem, size = 0x4000, scoped, tag = 'output window, operand 0, single buffered']
    %12 = vsyncpa [#allocation3], 0
    %13 = vsyncpa [#allocation6], 0
    %14 = vsyncpa [#allocation4], 0
    // Predicated region
    $region2: #{tpu_custom_call.1} parent=1 // pred_check
      _
    $region3: #{tpu_custom_call.1} parent=1 // pred_check_branch
      %16 = sbr.rel (0) target = $region5
    $region4: #{tpu_custom_call.1} parent=1 // pred_region
      %s18 = ssub.s32 512, 512
      %19 = vsyncadd [#allocation3], %s18
      %s20 = sshll.u32 [#allocation2], 4
      %s21 = int_to_ptr.vmem [resolvable:$true] %s20
      %26 = dma.hbm_to_vmem [thread:$0]  %s0, 512, %s21, [#allocation3], 128, 128, 8
    $region5: #{tpu_custom_call.1} parent=1 // pred_fallthru
      _
    // Predicated region
    $region6: #{tpu_custom_call.1} parent=1 // pred_check
      _
    $region7: #{tpu_custom_call.1} parent=1 // pred_check_branch
      %28 = sbr.rel (0) target = $region9
    $region8: #{tpu_custom_call.1} parent=1 // pred_region
      _
    $region9: #{tpu_custom_call.1} parent=1 // pred_fallthru
      _
    // Predicated region
    $region10: #{tpu_custom_call.1} parent=1 // pred_check
      _
    $region11: #{tpu_custom_call.1} parent=1 // pred_check_branch
      %30 = sbr.rel (0) target = $region13
    $region12: #{tpu_custom_call.1} parent=1 // pred_region
      _
    $region13: #{tpu_custom_call.1} parent=1 // pred_fallthru
      _
    // Predicated region
    $region14: #{tpu_custom_call.1} parent=1 // pred_check
      _
    $region15: #{tpu_custom_call.1} parent=1 // pred_check_branch
      %32 = sbr.rel (0) target = $region17
    $region16: #{tpu_custom_call.1} parent=1 // pred_region
      %s34 = ssub.s32 256, 256
      %35 = vsyncadd [#allocation6], %s34
      %s36 = sshll.u32 [#allocation5], 4
      %s37 = int_to_ptr.vmem [resolvable:$true] %s36
      %42 = dma.hbm_to_vmem [thread:$0]  %s3, 256, %s37, [#allocation6], 64, 64, 4
    $region17: #{tpu_custom_call.1} parent=1 // pred_fallthru
      _
    // Predicated region
    $region18: #{tpu_custom_call.1} parent=1 // pred_check
      _
    $region19: #{tpu_custom_call.1} parent=1 // pred_check_branch
      %44 = sbr.rel (0) target = $region21
    $region20: #{tpu_custom_call.1} parent=1 // pred_region
      _
    $region21: #{tpu_custom_call.1} parent=1 // pred_fallthru
      _
    // Predicated region
    $region22: #{tpu_custom_call.1} parent=1 // pred_check
      _
    $region23: #{tpu_custom_call.1} parent=1 // pred_check_branch
      %46 = sbr.rel (0) target = $region25
    $region24: #{tpu_custom_call.1} parent=1 // pred_region
      %s48 = ssub.s32 256, 256
      %49 = vsyncadd [#allocation6], %s48
      %s50 = sshll.u32 [#allocation7], 4
      %s51 = int_to_ptr.vmem [resolvable:$true] %s50
      %56 = dma.hbm_to_vmem [thread:$0]  %s5, 256, %s51, [#allocation6], 64, 64, 4
    $region25: #{tpu_custom_call.1} parent=1 // pred_fallthru
      _
    // Predicated region
    $region26: #{tpu_custom_call.1} parent=1 // pred_check
      _
    $region27: #{tpu_custom_call.1} parent=1 // pred_check_branch
      %58 = sbr.rel (0) target = $region29
    $region28: #{tpu_custom_call.1} parent=1 // pred_region
      _
    $region29: #{tpu_custom_call.1} parent=1 // pred_fallthru
      _
    // Predicated region
    $region30: #{tpu_custom_call.1} parent=1 // pred_check
      _
    $region31: #{tpu_custom_call.1} parent=1 // pred_check_branch
      %60 = sbr.rel (0) target = $region33
    $region32: #{tpu_custom_call.1} parent=1 // pred_region
      %61 = dma.done [#allocation3], 512
    $region33: #{tpu_custom_call.1} parent=1 // pred_fallthru
      _
    // Predicated region
    $region34: #{tpu_custom_call.1} parent=1 // pred_check
      _
    $region35: #{tpu_custom_call.1} parent=1 // pred_check_branch
      %63 = sbr.rel (0) target = $region37
    $region36: #{tpu_custom_call.1} parent=1 // pred_region
      %64 = dma.done [#allocation6], 256
    $region37: #{tpu_custom_call.1} parent=1 // pred_fallthru
      _
    // Predicated region
    $region38: #{tpu_custom_call.1} parent=1 // pred_check
      _
    $region39: #{tpu_custom_call.1} parent=1 // pred_check_branch
      %66 = sbr.rel (0) target = $region41
    $region40: #{tpu_custom_call.1} parent=1 // pred_region
      %67 = dma.done [#allocation6], 256
    $region41: #{tpu_custom_call.1} parent=1 // pred_fallthru
      _
    %v69 = vld [vmem:[#allocation2] sm:$0xff]
    %v70 = vld [vmem:[#allocation2 + $0x8] sm:$0xff]
    %v71 = vld [vmem:[#allocation2 + $0x10] sm:$0xff]
    %v72 = vld [vmem:[#allocation2 + $0x18] sm:$0xff]
    %vm73 = vcmask 261120
    %v74 = vsel %vm73, %v69, 0.0
    %75 = vadd.xlane.f32.xlu0 %v74
    %v76 = vpop.xlane.xlu0 %75
    %v77 = vsel %vm73, %v70, 0.0
    %78 = vadd.xlane.f32.xlu0 %v77
    %v79 = vpop.xlane.xlu0 %78
    %v80 = vsel %vm73, %v71, 0.0
    %81 = vadd.xlane.f32.xlu0 %v80
    %v82 = vpop.xlane.xlu0 %81
    %v83 = vsel %vm73, %v72, 0.0
    %84 = vadd.xlane.f32.xlu0 %v83
    %v85 = vpop.xlane.xlu0 %84
    %v86 = vrcp.pop 32.0
    %v87 = vmul.f32 %v76, %v86
    %v88 = vmul.f32 %v79, %v86
    %v89 = vmul.f32 %v82, %v86
    %v90 = vmul.f32 %v85, %v86
    %v91 = vmul.f32 %v69, %v69
    %v92 = vmul.f32 %v70, %v70
    %v93 = vmul.f32 %v71, %v71
    %v94 = vmul.f32 %v72, %v72
    %v95 = vsel %vm73, %v91, 0.0
    %96 = vadd.xlane.f32.xlu0 %v95
    %v97 = vpop.xlane.xlu0 %96
    %v98 = vsel %vm73, %v92, 0.0
    %99 = vadd.xlane.f32.xlu0 %v98
    %v100 = vpop.xlane.xlu0 %99
    %v101 = vsel %vm73, %v93, 0.0
    %102 = vadd.xlane.f32.xlu0 %v101
    %v103 = vpop.xlane.xlu0 %102
    %v104 = vsel %vm73, %v94, 0.0
    %105 = vadd.xlane.f32.xlu0 %v104
    %v106 = vpop.xlane.xlu0 %105
    %v107 = vmul.f32 %v97, %v86
    %v108 = vmul.f32 %v100, %v86
    %v109 = vmul.f32 %v103, %v86
    %v110 = vmul.f32 %v106, %v86
    %v111 = vmul.f32 %v87, %v87
    %v112 = vmul.f32 %v88, %v88
    %v113 = vmul.f32 %v89, %v89
    %v114 = vmul.f32 %v90, %v90
    %v115 = vsub.f32 %v107, %v111
    %v116 = vsub.f32 %v108, %v112
    %v117 = vsub.f32 %v109, %v113
    %v118 = vsub.f32 %v110, %v114
    %v119 = vmax.f32 %v115, 0.0
    %v120 = vmax.f32 %v116, 0.0
    %v121 = vmax.f32 %v117, 0.0
    %v122 = vmax.f32 %v118, 0.0
    %v123 = vsub.f32 %v69, %v87
    %v124 = vsub.f32 %v70, %v88
    %v125 = vsub.f32 %v71, %v89
    %v126 = vsub.f32 %v72, %v90
    %v127 = vadd.f32 %v119, 1e-05
    %v128 = vadd.f32 %v120, 1e-05
    %v129 = vadd.f32 %v121, 1e-05
    %v130 = vadd.f32 %v122, 1e-05
    %v131 = vrsqrt.pop %v127
    %v132 = vrsqrt.pop %v128
    %v133 = vrsqrt.pop %v129
    %v134 = vrsqrt.pop %v130
    %v135 = vmul.f32 %v123, %v131
    %v136 = vmul.f32 %v124, %v132
    %v137 = vmul.f32 %v125, %v133
    %v138 = vmul.f32 %v126, %v134
    %v139 = vld [vmem:[%s1] sm:$0x1]
    %v141 = vlaneseq
    %v142 = vshrl.u32 %v141, 7
    %v143 = vsub.s32 0, %v142
    %v144 = vrot.slane %v139, %v143
    %v146 = vmul.f32 %v135, %v144
    %v147 = vmul.f32 %v136, %v144
    %v148 = vmul.f32 %v137, %v144
    %v149 = vmul.f32 %v138, %v144
    %v150 = vld [vmem:[%s2] sm:$0x1]
    %v152 = vlaneseq
    %v153 = vshrl.u32 %v152, 7
    %v154 = vsub.s32 0, %v153
    %v155 = vrot.slane %v150, %v154
    %v157 = vadd.f32 %v146, %v155
    %v158 = vadd.f32 %v147, %v155
    %v159 = vadd.f32 %v148, %v155
    %v160 = vadd.f32 %v149, %v155
    %v161 = vld [vmem:[#allocation5] sm:$0xf]
    %v162 = vld [vmem:[#allocation5 + $0x4] sm:$0xf]
    %v163 = vld [vmem:[#allocation5 + $0x8] sm:$0xf]
    %v164 = vld [vmem:[#allocation5 + $0xc] sm:$0xf]
    %v165 = vpack.c.bf16 %v158, %v157
    %v166 = vpack.c.bf16 %v160, %v159
    %v167 = vld [vmem:[%s4] sm:$0x1]
    %v169 = vlaneseq
    %v170 = vshrl.u32 %v169, 7
    %v171 = vsub.s32 0, %v170
    %v172 = vrot.slane %v167, %v171
    %v178 = vunpack.c.l.b16 %v161
    %v179 = vunpack.c.l.b16 %v162
    %v180 = vunpack.c.l.b16 %v163
    %v181 = vunpack.c.l.b16 %v164
    %v182 = vpack.c.b16 %v179, %v178
    %v183 = vpack.c.b16 %v181, %v180
    %v187 = vsel %vm73, %v165, 0
    %v190 = vsel %vm73, %v166, 0
    %192 = vmatprep.subr.bf16.mxu0 0
    %193 = vmatpush1.bf16.msra.mxu0 0
    %194 = vmatprep.subr.bf16.mxu0 0
    %195 = vmatpush1.bf16.msra.mxu0 0
    %196 = vmatprep.subr.bf16.mxu0 0
    %197 = vmatpush1.bf16.msra.mxu0 0
    %198 = vmatprep.subr.bf16.mxu0 0
    %199 = vmatpush1.bf16.msra.mxu0 0
    %200 = vmatprep.subr.bf16.mxu0 0
    %201 = vmatpush1.bf16.msra.mxu0 0
    %202 = vmatprep.subr.bf16.mxu0 0
    %203 = vmatpush1.bf16.msra.mxu0 0
    %204 = vmatprep.subr.bf16.mxu0 0
    %205 = vmatpush1.bf16.msra.mxu0 %v183
    %206 = vmatprep.subr.bf16.mxu0 0
    %207 = vmatpush1.bf16.msra.mxu0 %v182
    %208 = vmatprep.subr.bf16.mxu0 0
    %209 = vmatpush2.bf16.msra.mxu0 0
    %210 = vmatprep.subr.bf16.mxu0 0
    %211 = vmatpush2.bf16.msra.mxu0 0
    %212 = vmatprep.subr.bf16.mxu0 0
    %213 = vmatpush2.bf16.msra.mxu0 0
    %214 = vmatprep.subr.bf16.mxu0 0
    %215 = vmatpush2.bf16.msra.mxu0 0
    %216 = vmatprep.subr.bf16.mxu0 0
    %217 = vmatpush2.bf16.msra.mxu0 0
    %218 = vmatprep.subr.bf16.mxu0 0
    %219 = vmatpush2.bf16.msra.mxu0 0
    %220 = vmatprep.subr.bf16.mxu0 0
    %221 = vmatpush2.bf16.msra.mxu0 0
    %222 = vmatprep.subr.bf16.mxu0 0
    %223 = vmatpush2.bf16.msra.mxu0 0
    %224 = vmatprep.mubr.bf16.mxu0 0
    %225 = vmatmul.mubr.bf16.gmra.mxu0 %v187
    %v226 = vpop.f32.mrf.mxu0
    %v227 = vadd.f32 %v172, %v226
    %v228 = vpop.f32.mrf.mxu0
    %v229 = vpop.f32.mrf.mxu0
    %v230 = vadd.f32 %v172, %v229
    %v231 = vpop.f32.mrf.mxu0
    %232 = vmatprep.mubr.bf16.mxu0 0
    %233 = vmatmul.mubr.bf16.gmra.mxu0 %v190
    %v234 = vpop.f32.mrf.mxu0
    %v235 = vadd.f32 %v172, %v234
    %v236 = vpop.f32.mrf.mxu0
    %v237 = vpop.f32.mrf.mxu0
    %v238 = vadd.f32 %v172, %v237
    %v239 = vpop.f32.mrf.mxu0
    %240 = vdwg.mxu0
    %v241 = vmul.f32 %v227, 0.5
    %v242 = vmul.f32 %v230, 0.5
    %v243 = vmul.f32 %v235, 0.5
    %v244 = vmul.f32 %v238, 0.5
    %v245 = vmul.f32 %v227, %v227
    %v246 = vmul.f32 %v230, %v230
    %v247 = vmul.f32 %v235, %v235
    %v248 = vmul.f32 %v238, %v238
    %v249 = vmul.f32 %v245, %v227
    %v250 = vmul.f32 %v246, %v230
    %v251 = vmul.f32 %v247, %v235
    %v252 = vmul.f32 %v248, %v238
    %v253 = vmul.f32 %v249, 0.044715
    %v254 = vmul.f32 %v250, 0.044715
    %v255 = vmul.f32 %v251, 0.044715
    %v256 = vmul.f32 %v252, 0.044715
    %v257 = vadd.f32 %v227, %v253
    %v258 = vadd.f32 %v230, %v254
    %v259 = vadd.f32 %v235, %v255
    %v260 = vadd.f32 %v238, %v256
    %v261 = vmul.f32 %v257, 0.7978846
    %v262 = vmul.f32 %v258, 0.7978846
    %v263 = vmul.f32 %v259, 0.7978846
    %v264 = vmul.f32 %v260, 0.7978846
    %v265 = vtanh.pop %v261
    %v266 = vtanh.pop %v262
    %v267 = vtanh.pop %v263
    %v268 = vtanh.pop %v264
    %v269 = vadd.f32 %v265, 1.0
    %v270 = vadd.f32 %v266, 1.0
    %v271 = vadd.f32 %v267, 1.0
    %v272 = vadd.f32 %v268, 1.0
    %v273 = vmul.f32 %v241, %v269
    %v274 = vmul.f32 %v242, %v270
    %v275 = vmul.f32 %v243, %v271
    %v276 = vmul.f32 %v244, %v272
    %v277 = vld [vmem:[#allocation7] sm:$0xf]
    %v278 = vld [vmem:[#allocation7 + $0x4] sm:$0xf]
    %v279 = vld [vmem:[#allocation7 + $0x8] sm:$0xf]
    %v280 = vld [vmem:[#allocation7 + $0xc] sm:$0xf]
    %v281 = vpack.c.bf16 %v274, %v273
    %v282 = vpack.c.bf16 %v276, %v275
    %v283 = vld [vmem:[%s6] sm:$0x1]
    %v285 = vlaneseq
    %v286 = vshrl.u32 %v285, 7
    %v287 = vsub.s32 0, %v286
    %v288 = vrot.slane %v283, %v287
    %v294 = vunpack.c.l.b16 %v277
    %v295 = vunpack.c.l.b16 %v278
    %v296 = vunpack.c.l.b16 %v279
    %v297 = vunpack.c.l.b16 %v280
    %v298 = vpack.c.b16 %v295, %v294
    %v299 = vpack.c.b16 %v297, %v296
    %v303 = vsel %vm73, %v281, 0
    %v306 = vsel %vm73, %v282, 0
    %308 = vmatprep.subr.bf16.mxu0 0
    %309 = vmatpush1.bf16.msra.mxu0 0
    %310 = vmatprep.subr.bf16.mxu0 0
    %311 = vmatpush1.bf16.msra.mxu0 0
    %312 = vmatprep.subr.bf16.mxu0 0
    %313 = vmatpush1.bf16.msra.mxu0 0
    %314 = vmatprep.subr.bf16.mxu0 0
    %315 = vmatpush1.bf16.msra.mxu0 0
    %316 = vmatprep.subr.bf16.mxu0 0
    %317 = vmatpush1.bf16.msra.mxu0 0
    %318 = vmatprep.subr.bf16.mxu0 0
    %319 = vmatpush1.bf16.msra.mxu0 0
    %320 = vmatprep.subr.bf16.mxu0 0
    %321 = vmatpush1.bf16.msra.mxu0 %v299
    %322 = vmatprep.subr.bf16.mxu0 0
    %323 = vmatpush1.bf16.msra.mxu0 %v298
    %324 = vmatprep.subr.bf16.mxu0 0
    %325 = vmatpush2.bf16.msra.mxu0 0
    %326 = vmatprep.subr.bf16.mxu0 0
    %327 = vmatpush2.bf16.msra.mxu0 0
    %328 = vmatprep.subr.bf16.mxu0 0
    %329 = vmatpush2.bf16.msra.mxu0 0
    %330 = vmatprep.subr.bf16.mxu0 0
    %331 = vmatpush2.bf16.msra.mxu0 0
    %332 = vmatprep.subr.bf16.mxu0 0
    %333 = vmatpush2.bf16.msra.mxu0 0
    %334 = vmatprep.subr.bf16.mxu0 0
    %335 = vmatpush2.bf16.msra.mxu0 0
    %336 = vmatprep.subr.bf16.mxu0 0
    %337 = vmatpush2.bf16.msra.mxu0 0
    %338 = vmatprep.subr.bf16.mxu0 0
    %339 = vmatpush2.bf16.msra.mxu0 0
    %340 = vmatprep.mubr.bf16.mxu0 0
    %341 = vmatmul.mubr.bf16.gmra.mxu0 %v303
    %v342 = vpop.f32.mrf.mxu0
    %v343 = vadd.f32 %v288, %v342
    %v344 = vpop.f32.mrf.mxu0
    %v345 = vpop.f32.mrf.mxu0
    %v346 = vadd.f32 %v288, %v345
    %v347 = vpop.f32.mrf.mxu0
    %348 = vmatprep.mubr.bf16.mxu0 0
    %349 = vmatmul.mubr.bf16.gmra.mxu0 %v306
    %v350 = vpop.f32.mrf.mxu0
    %v351 = vadd.f32 %v288, %v350
    %v352 = vpop.f32.mrf.mxu0
    %v353 = vpop.f32.mrf.mxu0
    %v354 = vadd.f32 %v288, %v353
    %v355 = vpop.f32.mrf.mxu0
    %356 = vdwg.mxu0
    %v357 = vadd.f32 %v69, %v343
    %v358 = vadd.f32 %v70, %v346
    %v359 = vadd.f32 %v71, %v351
    %v360 = vadd.f32 %v72, %v354
    %361 = vst.msk [vmem:[#allocation8] sm:$0xff] %vm73, %v357
    %362 = vst.msk [vmem:[#allocation8 + $0x8] sm:$0xff] %vm73, %v358
    %363 = vst.msk [vmem:[#allocation8 + $0x10] sm:$0xff] %vm73, %v359
    %364 = vst.msk [vmem:[#allocation8 + $0x18] sm:$0xff] %vm73, %v360
    // Predicated region
    $region42: #{tpu_custom_call.1} parent=1 // pred_check
      _
    $region43: #{tpu_custom_call.1} parent=1 // pred_check_branch
      %366 = sbr.rel (0) target = $region45
    $region44: #{tpu_custom_call.1} parent=1 // pred_region
      %s368 = ssub.s32 512, 512
      %369 = vsyncadd [#allocation4], %s368
      %s370 = sshll.u32 [#allocation8], 4
      %s371 = int_to_ptr.vmem [resolvable:$true] %s370
      %376 = dma.vmem_to_hbm [thread:$0]  %s371, 512, %s7, [#allocation4], 128, 128, 8
    $region45: #{tpu_custom_call.1} parent=1 // pred_fallthru
      _
    // Predicated region
    $region46: #{tpu_custom_call.1} parent=1 // pred_check
      _
    $region47: #{tpu_custom_call.1} parent=1 // pred_check_branch
      %378 = sbr.rel (0) target = $region49
    $region48: #{tpu_custom_call.1} parent=1 // pred_region
      %379 = dma.done [#allocation4], 512
    $region49: #{tpu_custom_call.1} parent=1 // pred_fallthru
      _
    %380 = vsyncpa [#allocation3], 1
    %381 = vsyncpa [#allocation6], 1
    %382 = vsyncpa [#allocation4], 1

</llo_original>
